<compile_context>
chip_gen: v6e
topology: v6e:2x2x1
jax: 0.10.0
libtpu: 0.0.40
codegen_flags: <defaults>
</compile_context>

<pallas_src>
import functools

import jax
import jax.numpy as jnp
from jax.experimental import pallas as pl
from jax.experimental.pallas import tpu as pltpu

_LANE = 128  # lane width / padded hidden size


def _round_up(x, m):
    return ((x + m - 1) // m) * m


def _mlp_kernel(x_ref,
                w1_ref, b1_ref,
                w2_ref, b2_ref,
                w3_ref, b3_ref,
                w4_ref, b4_ref,
                w5_ref, b5_ref,
                o_ref):
    """Entire MLP forward for one batch tile, fused in VMEM.

    All weights are pre-transposed to (in, out) and zero-padded to 128-wide outputs,
    so every matmul result / activation / store is a full 128-lane slab.
    """
    x = x_ref[...].astype(jnp.float32)

    h = jnp.dot(x, w1_ref[...], preferred_element_type=jnp.float32) + b1_ref[...]
    h = jnp.maximum(h, 0.0)
    # dropout (p=0.5) -> identity in eval mode

    h = jnp.dot(h, w2_ref[...], preferred_element_type=jnp.float32) + b2_ref[...]
    h = jnp.maximum(h, 0.0)

    h = jnp.dot(h, w3_ref[...], preferred_element_type=jnp.float32) + b3_ref[...]
    h = jnp.maximum(h, 0.0)

    h = jnp.dot(h, w4_ref[...], preferred_element_type=jnp.float32) + b4_ref[...]
    h = jnp.maximum(h, 0.0)

    out = jnp.dot(h, w5_ref[...], preferred_element_type=jnp.float32) + b5_ref[...]
    o_ref[...] = out.astype(o_ref.dtype)  # lane-dense (tile, 128) store


def _pad_params(params):
    """Zero-pad weights/biases so every layer output is 128 lanes wide.

    w1: (13,128) stays.  w2..w5 become (128,128); b2..b5 become (1,128).
    Padded rows/cols are zero, padded bias entries are zero -> valid lanes unchanged.
    """
    padded = {"w1": params["w1"], "b1": params["b1"]}
    for idx in (2, 3, 4, 5):
        w = params[f"w{idx}"]
        b = params[f"b{idx}"]
        fin, fout = w.shape
        padded[f"w{idx}"] = jnp.pad(w, ((0, _LANE - fin), (0, _LANE - fout)))
        padded[f"b{idx}"] = jnp.pad(b, ((0, 0), (0, _LANE - fout)))
    return padded


@functools.partial(jax.jit, static_argnames=("batch_tile",))
def dog_sound_model_forward(x, params, batch_tile=512):
    """x: (B, 13) float32.  params: PyTorch-layout (in,out) weights + (1,out) biases."""
    B, F = x.shape
    assert F == 13
    out_dim = params["w5"].shape[1]  # 3

    # Effective batch tile: multiple of 8, no larger than the (rounded-up) batch.
    tile = max(8, min(int(batch_tile), _round_up(B, 8)))
    tile = _round_up(tile, 8)
    Bp = _round_up(B, tile)
    if Bp != B:
        x = jnp.pad(x, ((0, Bp - B), (0, 0)))  # zero rows; sliced off below
    grid = (Bp // tile,)

    pp = _pad_params(params)

    # x / out tiled along batch; every weight/bias is one full block, reused each step.
    full = lambda arr: pl.BlockSpec(arr.shape, lambda i: (0, 0))
    in_specs = [pl.BlockSpec((tile, F), lambda i: (i, 0))]
    weight_bytes = 0
    for name in ("w1", "b1", "w2", "b2", "w3", "b3", "w4", "b4", "w5", "b5"):
        in_specs.append(full(pp[name]))
        weight_bytes += pp[name].size * 4
    out_specs = pl.BlockSpec((tile, _LANE), lambda i: (i, 0))

    # VMEM budget: double-buffered x + out tiles (lane-padded), resident weights
    # (double-buffered), live f32 activations, plus slack.  Capped for v7x (64 MiB).
    act_bytes = tile * _LANE * 4
    vmem_limit = min(64 << 20,
                     2 * act_bytes + 2 * act_bytes + 2 * weight_bytes
                     + 6 * act_bytes + (4 << 20))

    # Advisory cost hint for XLA scheduling (padded-network flops).
    flops_per_row = 2 * (13 * 128 + 4 * 128 * 128)
    cost = pl.CostEstimate(
        flops=Bp * flops_per_row,
        transcendentals=0,
        bytes_accessed=Bp * F * 4 + Bp * _LANE * 4 + weight_bytes,
    )

    out_padded = pl.pallas_call(
        _mlp_kernel,
        out_shape=jax.ShapeDtypeStruct((Bp, _LANE), jnp.float32),
        grid_spec=pltpu.PrefetchScalarGridSpec(
            num_scalar_prefetch=0,
            grid=grid,
            in_specs=in_specs,
            out_specs=out_specs,
        ),
        compiler_params=pltpu.CompilerParams(
            dimension_semantics=("parallel",),
            vmem_limit_bytes=int(vmem_limit),
        ),
        cost_estimate=cost,
    )(x, pp["w1"], pp["b1"], pp["w2"], pp["b2"],
      pp["w3"], pp["b3"], pp["w4"], pp["b4"], pp["w5"], pp["b5"])

    return out_padded[:B, :out_dim]


def init_params(key):
    """Deterministic init mimicking nn.Linear: U(-1/sqrt(fan_in), 1/sqrt(fan_in)).

    Weights stored as (in, out) (i.e. W.T of the PyTorch layout); biases as (1, out).
    """
    dims = [(13, 128), (128, 64), (64, 32), (32, 16), (16, 3)]
    params = {}
    for idx, (fan_in, fan_out) in enumerate(dims, start=1):
        key, kw, kb = jax.random.split(key, 3)
        bound = 1.0 / jnp.sqrt(jnp.float32(fan_in))
        params[f"w{idx}"] = jax.random.uniform(
            kw, (fan_in, fan_out), jnp.float32, -bound, bound)
        params[f"b{idx}"] = jax.random.uniform(
            kb, (1, fan_out), jnp.float32, -bound, bound)
    return params


def reference_forward(x, params):
    """Pure-JAX reference (eval-mode PyTorch semantics: dropout elided)."""
    h = jnp.maximum(x @ params["w1"] + params["b1"], 0.0)
    h = jnp.maximum(h @ params["w2"] + params["b2"], 0.0)
    h = jnp.maximum(h @ params["w3"] + params["b3"], 0.0)
    h = jnp.maximum(h @ params["w4"] + params["b4"], 0.0)
    return h @ params["w5"] + params["b5"]


if __name__ == "__main__":
    key = jax.random.PRNGKey(0)
    key, kx1, kx2 = jax.random.split(key, 3)
    params = init_params(key)

    # Small demo batch: single grid step (tile == batch), as recommended for tiny B.
    B1 = 16
    x1 = jax.random.normal(kx1, (B1, 13), jnp.float32)
    out1 = jax.block_until_ready(dog_sound_model_forward(x1, params))
    ref1 = reference_forward(x1, params)
    assert out1.shape == (B1, 3)
    assert jnp.allclose(out1, ref1, atol=1e-4, rtol=1e-4), "mismatch vs reference (B=16)"

    # Ragged batch + multi-step grid: exercises batch padding and the tiled path.
    B2 = 300
    x2 = jax.random.normal(kx2, (B2, 13), jnp.float32)
    out2 = jax.block_until_ready(dog_sound_model_forward(x2, params, batch_tile=128))
    ref2 = reference_forward(x2, params)
    assert out2.shape == (B2, 3)
    assert jnp.allclose(out2, ref2, atol=1e-4, rtol=1e-4), "mismatch vs reference (B=300)"

    print("KERNEL_OK")
</pallas_src>

<mosaic_0001>
module attributes {stable_mosaic.version = 11 : i64} {
  func.func @_mlp_kernel(%arg0: i32, %arg1: memref<16x13xf32, #tpu.memory_space<vmem>>, %arg2: memref<13x128xf32, #tpu.memory_space<vmem>>, %arg3: memref<1x128xf32, #tpu.memory_space<vmem>>, %arg4: memref<128x128xf32, #tpu.memory_space<vmem>>, %arg5: memref<1x128xf32, #tpu.memory_space<vmem>>, %arg6: memref<128x128xf32, #tpu.memory_space<vmem>>, %arg7: memref<1x128xf32, #tpu.memory_space<vmem>>, %arg8: memref<128x128xf32, #tpu.memory_space<vmem>>, %arg9: memref<1x128xf32, #tpu.memory_space<vmem>>, %arg10: memref<128x128xf32, #tpu.memory_space<vmem>>, %arg11: memref<1x128xf32, #tpu.memory_space<vmem>>, %arg12: memref<16x128xf32, #tpu.memory_space<vmem>>) attributes {dimension_semantics = [#tpu.dimension_semantics<parallel>], iteration_bounds = array<i64: 1>, scalar_prefetch = 0 : i64, scratch_operands = 0 : i64, tpu.core_type = #tpu.core_type<tc>, window_params = [{transform_indices = @transform_0, window_bounds = array<i64: 16, 13>}, {pipeline_mode = #tpu.pipeline_mode<synchronous>, transform_indices = @transform_1, window_bounds = array<i64: 13, 128>}, {pipeline_mode = #tpu.pipeline_mode<synchronous>, transform_indices = @transform_2, window_bounds = array<i64: 1, 128>}, {pipeline_mode = #tpu.pipeline_mode<synchronous>, transform_indices = @transform_3, window_bounds = array<i64: 128, 128>}, {pipeline_mode = #tpu.pipeline_mode<synchronous>, transform_indices = @transform_4, window_bounds = array<i64: 1, 128>}, {pipeline_mode = #tpu.pipeline_mode<synchronous>, transform_indices = @transform_5, window_bounds = array<i64: 128, 128>}, {pipeline_mode = #tpu.pipeline_mode<synchronous>, transform_indices = @transform_6, window_bounds = array<i64: 1, 128>}, {pipeline_mode = #tpu.pipeline_mode<synchronous>, transform_indices = @transform_7, window_bounds = array<i64: 128, 128>}, {pipeline_mode = #tpu.pipeline_mode<synchronous>, transform_indices = @transform_8, window_bounds = array<i64: 1, 128>}, {pipeline_mode = #tpu.pipeline_mode<synchronous>, transform_indices = @transform_9, window_bounds = array<i64: 128, 128>}, {pipeline_mode = #tpu.pipeline_mode<synchronous>, transform_indices = @transform_10, window_bounds = array<i64: 1, 128>}, {transform_indices = @transform_11, window_bounds = array<i64: 16, 128>}]} {
    %c0 = arith.constant 0 : index
    %c0_0 = arith.constant 0 : index
    %0 = vector.load %arg1[%c0, %c0_0] : memref<16x13xf32, #tpu.memory_space<vmem>>, vector<16x13xf32>
    %c0_1 = arith.constant 0 : index
    %c0_2 = arith.constant 0 : index
    %1 = vector.load %arg2[%c0_1, %c0_2] : memref<13x128xf32, #tpu.memory_space<vmem>>, vector<13x128xf32>
    %cst = arith.constant dense<0.000000e+00> : vector<16x128xf32>
    %2 = tpu.matmul %0, %1, %cst {dimension_numbers = #tpu.dot_dimension_numbers<[1], [0], [0], [1], [0, 0, 1, 1], [], []>} : vector<16x13xf32>, vector<13x128xf32>, vector<16x128xf32> -> vector<16x128xf32>
    %c0_3 = arith.constant 0 : index
    %c0_4 = arith.constant 0 : index
    %3 = vector.load %arg3[%c0_3, %c0_4] : memref<1x128xf32, #tpu.memory_space<vmem>>, vector<1x128xf32>
    %4 = vector.broadcast %3 : vector<1x128xf32> to vector<16x128xf32>
    %5 = arith.addf %2, %4 : vector<16x128xf32>
    %cst_5 = arith.constant 0.000000e+00 : f32
    %6 = vector.broadcast %cst_5 : f32 to vector<16x128xf32>
    %7 = arith.maximumf %5, %6 : vector<16x128xf32>
    %c0_6 = arith.constant 0 : index
    %c0_7 = arith.constant 0 : index
    %8 = vector.load %arg4[%c0_6, %c0_7] : memref<128x128xf32, #tpu.memory_space<vmem>>, vector<128x128xf32>
    %cst_8 = arith.constant dense<0.000000e+00> : vector<16x128xf32>
    %9 = tpu.matmul %7, %8, %cst_8 {dimension_numbers = #tpu.dot_dimension_numbers<[1], [0], [0], [1], [0, 0, 1, 1], [], []>} : vector<16x128xf32>, vector<128x128xf32>, vector<16x128xf32> -> vector<16x128xf32>
    %c0_9 = arith.constant 0 : index
    %c0_10 = arith.constant 0 : index
    %10 = vector.load %arg5[%c0_9, %c0_10] : memref<1x128xf32, #tpu.memory_space<vmem>>, vector<1x128xf32>
    %11 = vector.broadcast %10 : vector<1x128xf32> to vector<16x128xf32>
    %12 = arith.addf %9, %11 : vector<16x128xf32>
    %cst_11 = arith.constant 0.000000e+00 : f32
    %13 = vector.broadcast %cst_11 : f32 to vector<16x128xf32>
    %14 = arith.maximumf %12, %13 : vector<16x128xf32>
    %c0_12 = arith.constant 0 : index
    %c0_13 = arith.constant 0 : index
    %15 = vector.load %arg6[%c0_12, %c0_13] : memref<128x128xf32, #tpu.memory_space<vmem>>, vector<128x128xf32>
    %cst_14 = arith.constant dense<0.000000e+00> : vector<16x128xf32>
    %16 = tpu.matmul %14, %15, %cst_14 {dimension_numbers = #tpu.dot_dimension_numbers<[1], [0], [0], [1], [0, 0, 1, 1], [], []>} : vector<16x128xf32>, vector<128x128xf32>, vector<16x128xf32> -> vector<16x128xf32>
    %c0_15 = arith.constant 0 : index
    %c0_16 = arith.constant 0 : index
    %17 = vector.load %arg7[%c0_15, %c0_16] : memref<1x128xf32, #tpu.memory_space<vmem>>, vector<1x128xf32>
    %18 = vector.broadcast %17 : vector<1x128xf32> to vector<16x128xf32>
    %19 = arith.addf %16, %18 : vector<16x128xf32>
    %cst_17 = arith.constant 0.000000e+00 : f32
    %20 = vector.broadcast %cst_17 : f32 to vector<16x128xf32>
    %21 = arith.maximumf %19, %20 : vector<16x128xf32>
    %c0_18 = arith.constant 0 : index
    %c0_19 = arith.constant 0 : index
    %22 = vector.load %arg8[%c0_18, %c0_19] : memref<128x128xf32, #tpu.memory_space<vmem>>, vector<128x128xf32>
    %cst_20 = arith.constant dense<0.000000e+00> : vector<16x128xf32>
    %23 = tpu.matmul %21, %22, %cst_20 {dimension_numbers = #tpu.dot_dimension_numbers<[1], [0], [0], [1], [0, 0, 1, 1], [], []>} : vector<16x128xf32>, vector<128x128xf32>, vector<16x128xf32> -> vector<16x128xf32>
    %c0_21 = arith.constant 0 : index
    %c0_22 = arith.constant 0 : index
    %24 = vector.load %arg9[%c0_21, %c0_22] : memref<1x128xf32, #tpu.memory_space<vmem>>, vector<1x128xf32>
    %25 = vector.broadcast %24 : vector<1x128xf32> to vector<16x128xf32>
    %26 = arith.addf %23, %25 : vector<16x128xf32>
    %cst_23 = arith.constant 0.000000e+00 : f32
    %27 = vector.broadcast %cst_23 : f32 to vector<16x128xf32>
    %28 = arith.maximumf %26, %27 : vector<16x128xf32>
    %c0_24 = arith.constant 0 : index
    %c0_25 = arith.constant 0 : index
    %29 = vector.load %arg10[%c0_24, %c0_25] : memref<128x128xf32, #tpu.memory_space<vmem>>, vector<128x128xf32>
    %cst_26 = arith.constant dense<0.000000e+00> : vector<16x128xf32>
    %30 = tpu.matmul %28, %29, %cst_26 {dimension_numbers = #tpu.dot_dimension_numbers<[1], [0], [0], [1], [0, 0, 1, 1], [], []>} : vector<16x128xf32>, vector<128x128xf32>, vector<16x128xf32> -> vector<16x128xf32>
    %c0_27 = arith.constant 0 : index
    %c0_28 = arith.constant 0 : index
    %31 = vector.load %arg11[%c0_27, %c0_28] : memref<1x128xf32, #tpu.memory_space<vmem>>, vector<1x128xf32>
    %32 = vector.broadcast %31 : vector<1x128xf32> to vector<16x128xf32>
    %33 = arith.addf %30, %32 : vector<16x128xf32>
    %c0_29 = arith.constant 0 : index
    %c0_30 = arith.constant 0 : index
    %34 = vector.load %arg12[%c0_29, %c0_30] : memref<16x128xf32, #tpu.memory_space<vmem>>, vector<16x128xf32>
    tpu.vector_store %arg12[%c0_29, %c0_30], %33 {strides = array<i32>} : memref<16x128xf32, #tpu.memory_space<vmem>>, vector<16x128xf32>,
    return
  }
  func.func @transform_0(%arg0: i32) -> (i32, i32) {
    %c0_i32 = arith.constant 0 : i32
    %c0_i32_0 = arith.constant 0 : i32
    return %arg0, %c0_i32 : i32, i32
  }
  func.func @transform_1(%arg0: i32) -> (i32, i32) {
    %c0_i32 = arith.constant 0 : i32
    %c0_i32_0 = arith.constant 0 : i32
    %c0_i32_1 = arith.constant 0 : i32
    return %c0_i32, %c0_i32_0 : i32, i32
  }
  func.func @transform_2(%arg0: i32) -> (i32, i32) {
    %c0_i32 = arith.constant 0 : i32
    %c0_i32_0 = arith.constant 0 : i32
    %c0_i32_1 = arith.constant 0 : i32
    return %c0_i32, %c0_i32_0 : i32, i32
  }
  func.func @transform_3(%arg0: i32) -> (i32, i32) {
    %c0_i32 = arith.constant 0 : i32
    %c0_i32_0 = arith.constant 0 : i32
    %c0_i32_1 = arith.constant 0 : i32
    return %c0_i32, %c0_i32_0 : i32, i32
  }
  func.func @transform_4(%arg0: i32) -> (i32, i32) {
    %c0_i32 = arith.constant 0 : i32
    %c0_i32_0 = arith.constant 0 : i32
    %c0_i32_1 = arith.constant 0 : i32
    return %c0_i32, %c0_i32_0 : i32, i32
  }
  func.func @transform_5(%arg0: i32) -> (i32, i32) {
    %c0_i32 = arith.constant 0 : i32
    %c0_i32_0 = arith.constant 0 : i32
    %c0_i32_1 = arith.constant 0 : i32
    return %c0_i32, %c0_i32_0 : i32, i32
  }
  func.func @transform_6(%arg0: i32) -> (i32, i32) {
    %c0_i32 = arith.constant 0 : i32
    %c0_i32_0 = arith.constant 0 : i32
    %c0_i32_1 = arith.constant 0 : i32
    return %c0_i32, %c0_i32_0 : i32, i32
  }
  func.func @transform_7(%arg0: i32) -> (i32, i32) {
    %c0_i32 = arith.constant 0 : i32
    %c0_i32_0 = arith.constant 0 : i32
    %c0_i32_1 = arith.constant 0 : i32
    return %c0_i32, %c0_i32_0 : i32, i32
  }
  func.func @transform_8(%arg0: i32) -> (i32, i32) {
    %c0_i32 = arith.constant 0 : i32
    %c0_i32_0 = arith.constant 0 : i32
    %c0_i32_1 = arith.constant 0 : i32
    return %c0_i32, %c0_i32_0 : i32, i32
  }
  func.func @transform_9(%arg0: i32) -> (i32, i32) {
    %c0_i32 = arith.constant 0 : i32
    %c0_i32_0 = arith.constant 0 : i32
    %c0_i32_1 = arith.constant 0 : i32
    return %c0_i32, %c0_i32_0 : i32, i32
  }
  func.func @transform_10(%arg0: i32) -> (i32, i32) {
    %c0_i32 = arith.constant 0 : i32
    %c0_i32_0 = arith.constant 0 : i32
    %c0_i32_1 = arith.constant 0 : i32
    return %c0_i32, %c0_i32_0 : i32, i32
  }
  func.func @transform_11(%arg0: i32) -> (i32, i32) {
    %c0_i32 = arith.constant 0 : i32
    %c0_i32_0 = arith.constant 0 : i32
    return %arg0, %c0_i32 : i32, i32
  }
}

</mosaic_0001>

<llo_original>
// kernel: dog_sound_model_forward.1
$region0: #{dog_sound_model_forward.1}
  #allocation0 [shape = 'u32[]', space=smem, size = 0x4, offset = 0x4, fixed_abs, tag = 'smem constant byte address 0x4 - core index']
  #allocation1 [shape = 'u32[144,128]{1,0:T(1,128)}', space=vmem, size = 0x12000, scoped, tag = 'internal scratch']
  %s0 = inlined_call_operand.vmem [shape: f32[16,13], index: 0, kind: input, shape index: {}]
  %s1 = inlined_call_operand.vmem [shape: f32[13,128], index: 1, kind: input, shape index: {}]
  %s2 = inlined_call_operand.vmem [shape: f32[1,128], index: 2, kind: input, shape index: {}]
  %s3 = inlined_call_operand.vmem [shape: f32[128,128], index: 3, kind: input, shape index: {}]
  %s4 = inlined_call_operand.vmem [shape: f32[1,128], index: 4, kind: input, shape index: {}]
  %s5 = inlined_call_operand.vmem [shape: f32[128,128], index: 5, kind: input, shape index: {}]
  %s6 = inlined_call_operand.vmem [shape: f32[1,128], index: 6, kind: input, shape index: {}]
  %s7 = inlined_call_operand.vmem [shape: f32[128,128], index: 7, kind: input, shape index: {}]
  %s8 = inlined_call_operand.vmem [shape: f32[1,128], index: 8, kind: input, shape index: {}]
  %s9 = inlined_call_operand.vmem [shape: f32[128,128], index: 9, kind: input, shape index: {}]
  %s10 = inlined_call_operand.vmem [shape: f32[1,128], index: 10, kind: input, shape index: {}]
  %s11 = inlined_call_operand.vmem [shape: f32[16,128], index: 11, kind: output, shape index: {}]
  %s12 = sld [smem:[#allocation0]]
  $region54: #{dog_sound_model_forward.1} parent=0
    _
  %s14 = ssub.s32 1, %s12
  %s15 = scalar_select 0, %s14, %s12
  // Predicated region
  $region2: #{dog_sound_model_forward.1} parent=0 // pred_check
    _
  $region3: #{dog_sound_model_forward.1} parent=0 // pred_check_branch
    %17 = sbr.rel (0) target = $region5
  $region4: #{dog_sound_model_forward.1} parent=0 // pred_region
    _
  $region5: #{dog_sound_model_forward.1} parent=0 // pred_fallthru
    _
  // Predicated region
  $region6: #{dog_sound_model_forward.1} parent=0 // pred_check
    _
  $region7: #{dog_sound_model_forward.1} parent=0 // pred_check_branch
    %19 = sbr.rel (0) target = $region9
  $region8: #{dog_sound_model_forward.1} parent=0 // pred_region
    _
  $region9: #{dog_sound_model_forward.1} parent=0 // pred_fallthru
    _
  // Predicated region
  $region10: #{dog_sound_model_forward.1} parent=0 // pred_check
    _
  $region11: #{dog_sound_model_forward.1} parent=0 // pred_check_branch
    %21 = sbr.rel (0) target = $region13
  $region12: #{dog_sound_model_forward.1} parent=0 // pred_region
    _
  $region13: #{dog_sound_model_forward.1} parent=0 // pred_fallthru
    _
  // Predicated region
  $region14: #{dog_sound_model_forward.1} parent=0 // pred_check
    _
  $region15: #{dog_sound_model_forward.1} parent=0 // pred_check_branch
    %23 = sbr.rel (0) target = $region17
  $region16: #{dog_sound_model_forward.1} parent=0 // pred_region
    _
  $region17: #{dog_sound_model_forward.1} parent=0 // pred_fallthru
    _
  // Predicated region
  $region18: #{dog_sound_model_forward.1} parent=0 // pred_check
    _
  $region19: #{dog_sound_model_forward.1} parent=0 // pred_check_branch
    %25 = sbr.rel (0) target = $region21
  $region20: #{dog_sound_model_forward.1} parent=0 // pred_region
    _
  $region21: #{dog_sound_model_forward.1} parent=0 // pred_fallthru
    _
  // Predicated region
  $region22: #{dog_sound_model_forward.1} parent=0 // pred_check
    _
  $region23: #{dog_sound_model_forward.1} parent=0 // pred_check_branch
    %27 = sbr.rel (0) target = $region25
  $region24: #{dog_sound_model_forward.1} parent=0 // pred_region
    _
  $region25: #{dog_sound_model_forward.1} parent=0 // pred_fallthru
    _
  // Predicated region
  $region26: #{dog_sound_model_forward.1} parent=0 // pred_check
    _
  $region27: #{dog_sound_model_forward.1} parent=0 // pred_check_branch
    %29 = sbr.rel (0) target = $region29
  $region28: #{dog_sound_model_forward.1} parent=0 // pred_region
    _
  $region29: #{dog_sound_model_forward.1} parent=0 // pred_fallthru
    _
  // Predicated region
  $region30: #{dog_sound_model_forward.1} parent=0 // pred_check
    _
  $region31: #{dog_sound_model_forward.1} parent=0 // pred_check_branch
    %31 = sbr.rel (0) target = $region33
  $region32: #{dog_sound_model_forward.1} parent=0 // pred_region
    _
  $region33: #{dog_sound_model_forward.1} parent=0 // pred_fallthru
    _
  // Predicated region
  $region34: #{dog_sound_model_forward.1} parent=0 // pred_check
    _
  $region35: #{dog_sound_model_forward.1} parent=0 // pred_check_branch
    %33 = sbr.rel (0) target = $region37
  $region36: #{dog_sound_model_forward.1} parent=0 // pred_region
    _
  $region37: #{dog_sound_model_forward.1} parent=0 // pred_fallthru
    _
  // Predicated region
  $region38: #{dog_sound_model_forward.1} parent=0 // pred_check
    _
  $region39: #{dog_sound_model_forward.1} parent=0 // pred_check_branch
    %35 = sbr.rel (0) target = $region41
  $region40: #{dog_sound_model_forward.1} parent=0 // pred_region
    _
  $region41: #{dog_sound_model_forward.1} parent=0 // pred_fallthru
    _
  // Predicated region
  $region42: #{dog_sound_model_forward.1} parent=0 // pred_check
    _
  $region43: #{dog_sound_model_forward.1} parent=0 // pred_check_branch
    %37 = sbr.rel (0) target = $region45
  $region44: #{dog_sound_model_forward.1} parent=0 // pred_region
    _
  $region45: #{dog_sound_model_forward.1} parent=0 // pred_fallthru
    _
  %v38 = vld [vmem:[%s0] sm:$0xff]
  %v39 = vld [vmem:[%s0 + $0x8] sm:$0xff]
  %v40 = vld [vmem:[%s1] sm:$0xff]
  %v41 = vld [vmem:[%s1 + $0x8] sm:$0x1f]
  %v42 = vld [vmem:[%s2] sm:$0x1]
  %v44 = vlaneseq
  %v45 = vshrl.u32 %v44, 7
  %v46 = vsub.s32 0, %v45
  %v47 = vrot.slane %v42, %v46
  %vm49 = vcmask 105472
  %v51 = vsel %vm49, %v38, 0
  %v54 = vsel %vm49, %v39, 0
  %vm56 = vcmask 1044480
  %v58 = vsel %vm56, %v41, 0
  %60 = vmatprep.subr.mxu0 0.0
  %61 = vmatpush1.msra.mxu0 0.0
  %62 = vmatprep.subr.mxu0 0.0
  %63 = vmatpush1.msra.mxu0 0.0
  %64 = vmatprep.subr.mxu0 0.0
  %65 = vmatpush1.msra.mxu0 0.0
  %66 = vmatprep.subr.mxu0 0.0
  %67 = vmatpush1.msra.mxu0 0.0
  %68 = vmatprep.subr.mxu0 0.0
  %69 = vmatpush1.msra.mxu0 0.0
  %70 = vmatprep.subr.mxu0 0.0
  %71 = vmatpush1.msra.mxu0 0.0
  %72 = vmatprep.subr.mxu0 0.0
  %73 = vmatpush1.msra.mxu0 0.0
  %74 = vmatprep.subr.mxu0 0.0
  %75 = vmatpush1.msra.mxu0 0.0
  %76 = vmatprep.subr.mxu0 0.0
  %77 = vmatpush1.msra.mxu0 0.0
  %78 = vmatprep.subr.mxu0 0.0
  %79 = vmatpush1.msra.mxu0 0.0
  %80 = vmatprep.subr.mxu0 0.0
  %81 = vmatpush1.msra.mxu0 0.0
  %82 = vmatprep.subr.mxu0 0.0
  %83 = vmatpush1.msra.mxu0 0.0
  %84 = vmatprep.subr.mxu0 0.0
  %85 = vmatpush1.msra.mxu0 0.0
  %86 = vmatprep.subr.mxu0 0.0
  %87 = vmatpush1.msra.mxu0 0.0
  %88 = vmatprep.subr.mxu0 0.0
  %89 = vmatpush1.msra.mxu0 %v58
  %90 = vmatprep.subr.mxu0 0.0
  %91 = vmatpush1.msra.mxu0 %v40
  %92 = vmatprep.subr.mxu0 0.0
  %93 = vmatpush2.msra.mxu0 0.0
  %94 = vmatprep.subr.mxu0 0.0
  %95 = vmatpush2.msra.mxu0 0.0
  %96 = vmatprep.subr.mxu0 0.0
  %97 = vmatpush2.msra.mxu0 0.0
  %98 = vmatprep.subr.mxu0 0.0
  %99 = vmatpush2.msra.mxu0 0.0
  %100 = vmatprep.subr.mxu0 0.0
  %101 = vmatpush2.msra.mxu0 0.0
  %102 = vmatprep.subr.mxu0 0.0
  %103 = vmatpush2.msra.mxu0 0.0
  %104 = vmatprep.subr.mxu0 0.0
  %105 = vmatpush2.msra.mxu0 0.0
  %106 = vmatprep.subr.mxu0 0.0
  %107 = vmatpush2.msra.mxu0 0.0
  %108 = vmatprep.subr.mxu0 0.0
  %109 = vmatpush2.msra.mxu0 0.0
  %110 = vmatprep.subr.mxu0 0.0
  %111 = vmatpush2.msra.mxu0 0.0
  %112 = vmatprep.subr.mxu0 0.0
  %113 = vmatpush2.msra.mxu0 0.0
  %114 = vmatprep.subr.mxu0 0.0
  %115 = vmatpush2.msra.mxu0 0.0
  %116 = vmatprep.subr.mxu0 0.0
  %117 = vmatpush2.msra.mxu0 0.0
  %118 = vmatprep.subr.mxu0 0.0
  %119 = vmatpush2.msra.mxu0 0.0
  %120 = vmatprep.subr.mxu0 0.0
  %121 = vmatpush2.msra.mxu0 0.0
  %122 = vmatprep.subr.mxu0 0.0
  %123 = vmatpush2.msra.mxu0 0.0
  %124 = vmatprep.mubr.f32.mxu0 0.0
  %125 = vmatmul.mubr.f32.gmra.mxu0 %v51
  %v126 = vpop.f32.mrf.mxu0
  %v127 = vadd.f32 %v47, %v126
  %v128 = vpop.f32.mrf.mxu0
  %129 = vmatprep.mubr.f32.mxu0 0.0
  %130 = vmatmul.mubr.f32.gmra.mxu0 %v54
  %v131 = vpop.f32.mrf.mxu0
  %v132 = vadd.f32 %v47, %v131
  %v133 = vpop.f32.mrf.mxu0
  %134 = vdwg.mxu0
  %v135 = vmax.f32 %v127, 0.0
  %v136 = vmax.f32 %v132, 0.0
  %v137 = vld [vmem:[%s3] sm:$0xff]
  %v138 = vld [vmem:[%s3 + $0x8] sm:$0xff]
  %v139 = vld [vmem:[%s3 + $0x10] sm:$0xff]
  %v140 = vld [vmem:[%s3 + $0x18] sm:$0xff]
  %v141 = vld [vmem:[%s3 + $0x20] sm:$0xff]
  %v142 = vld [vmem:[%s3 + $0x28] sm:$0xff]
  %v143 = vld [vmem:[%s3 + $0x30] sm:$0xff]
  %v144 = vld [vmem:[%s3 + $0x38] sm:$0xff]
  %v145 = vld [vmem:[%s3 + $0x40] sm:$0xff]
  %v146 = vld [vmem:[%s3 + $0x48] sm:$0xff]
  %v147 = vld [vmem:[%s3 + $0x50] sm:$0xff]
  %v148 = vld [vmem:[%s3 + $0x58] sm:$0xff]
  %v149 = vld [vmem:[%s3 + $0x60] sm:$0xff]
  %v150 = vld [vmem:[%s3 + $0x68] sm:$0xff]
  %v151 = vld [vmem:[%s3 + $0x70] sm:$0xff]
  %v152 = vld [vmem:[%s3 + $0x78] sm:$0xff]
  %v153 = vld [vmem:[%s4] sm:$0x1]
  %v155 = vlaneseq
  %v156 = vshrl.u32 %v155, 7
  %v157 = vsub.s32 0, %v156
  %v158 = vrot.slane %v153, %v157
  %160 = vmatprep.subr.mxu0 0.0
  %161 = vmatpush1.msra.mxu0 %v152
  %162 = vmatprep.subr.mxu0 0.0
  %163 = vmatpush1.msra.mxu0 %v151
  %164 = vmatprep.subr.mxu0 0.0
  %165 = vmatpush1.msra.mxu0 %v150
  %166 = vmatprep.subr.mxu0 0.0
  %167 = vmatpush1.msra.mxu0 %v149
  %168 = vmatprep.subr.mxu0 0.0
  %169 = vmatpush1.msra.mxu0 %v148
  %170 = vmatprep.subr.mxu0 0.0
  %171 = vmatpush1.msra.mxu0 %v147
  %172 = vmatprep.subr.mxu0 0.0
  %173 = vmatpush1.msra.mxu0 %v146
  %174 = vmatprep.subr.mxu0 0.0
  %175 = vmatpush1.msra.mxu0 %v145
  %176 = vmatprep.subr.mxu0 0.0
  %177 = vmatpush1.msra.mxu0 %v144
  %178 = vmatprep.subr.mxu0 0.0
  %179 = vmatpush1.msra.mxu0 %v143
  %180 = vmatprep.subr.mxu0 0.0
  %181 = vmatpush1.msra.mxu0 %v142
  %182 = vmatprep.subr.mxu0 0.0
  %183 = vmatpush1.msra.mxu0 %v141
  %184 = vmatprep.subr.mxu0 0.0
  %185 = vmatpush1.msra.mxu0 %v140
  %186 = vmatprep.subr.mxu0 0.0
  %187 = vmatpush1.msra.mxu0 %v139
  %188 = vmatprep.subr.mxu0 0.0
  %189 = vmatpush1.msra.mxu0 %v138
  %190 = vmatprep.subr.mxu0 0.0
  %191 = vmatpush1.msra.mxu0 %v137
  %192 = vmatprep.subr.mxu0 0.0
  %193 = vmatpush2.msra.mxu0 0.0
  %194 = vmatprep.subr.mxu0 0.0
  %195 = vmatpush2.msra.mxu0 0.0
  %196 = vmatprep.subr.mxu0 0.0
  %197 = vmatpush2.msra.mxu0 0.0
  %198 = vmatprep.subr.mxu0 0.0
  %199 = vmatpush2.msra.mxu0 0.0
  %200 = vmatprep.subr.mxu0 0.0
  %201 = vmatpush2.msra.mxu0 0.0
  %202 = vmatprep.subr.mxu0 0.0
  %203 = vmatpush2.msra.mxu0 0.0
  %204 = vmatprep.subr.mxu0 0.0
  %205 = vmatpush2.msra.mxu0 0.0
  %206 = vmatprep.subr.mxu0 0.0
  %207 = vmatpush2.msra.mxu0 0.0
  %208 = vmatprep.subr.mxu0 0.0
  %209 = vmatpush2.msra.mxu0 0.0
  %210 = vmatprep.subr.mxu0 0.0
  %211 = vmatpush2.msra.mxu0 0.0
  %212 = vmatprep.subr.mxu0 0.0
  %213 = vmatpush2.msra.mxu0 0.0
  %214 = vmatprep.subr.mxu0 0.0
  %215 = vmatpush2.msra.mxu0 0.0
  %216 = vmatprep.subr.mxu0 0.0
  %217 = vmatpush2.msra.mxu0 0.0
  %218 = vmatprep.subr.mxu0 0.0
  %219 = vmatpush2.msra.mxu0 0.0
  %220 = vmatprep.subr.mxu0 0.0
  %221 = vmatpush2.msra.mxu0 0.0
  %222 = vmatprep.subr.mxu0 0.0
  %223 = vmatpush2.msra.mxu0 0.0
  %224 = vmatprep.mubr.f32.mxu0 0.0
  %225 = vmatmul.mubr.f32.gmra.mxu0 %v135
  %v226 = vpop.f32.mrf.mxu0
  %v227 = vadd.f32 %v158, %v226
  %v228 = vpop.f32.mrf.mxu0
  %229 = vmatprep.mubr.f32.mxu0 0.0
  %230 = vmatmul.mubr.f32.gmra.mxu0 %v136
  %v231 = vpop.f32.mrf.mxu0
  %v232 = vadd.f32 %v158, %v231
  %v233 = vpop.f32.mrf.mxu0
  %234 = vdwg.mxu0
  %v235 = vmax.f32 %v227, 0.0
  %v236 = vmax.f32 %v232, 0.0
  %v237 = vld [vmem:[%s5] sm:$0xff]
  %v238 = vld [vmem:[%s5 + $0x8] sm:$0xff]
  %v239 = vld [vmem:[%s5 + $0x10] sm:$0xff]
  %v240 = vld [vmem:[%s5 + $0x18] sm:$0xff]
  %v241 = vld [vmem:[%s5 + $0x20] sm:$0xff]
  %v242 = vld [vmem:[%s5 + $0x28] sm:$0xff]
  %v243 = vld [vmem:[%s5 + $0x30] sm:$0xff]
  %v244 = vld [vmem:[%s5 + $0x38] sm:$0xff]
  %v245 = vld [vmem:[%s5 + $0x40] sm:$0xff]
  %v246 = vld [vmem:[%s5 + $0x48] sm:$0xff]
  %v247 = vld [vmem:[%s5 + $0x50] sm:$0xff]
  %v248 = vld [vmem:[%s5 + $0x58] sm:$0xff]
  %v249 = vld [vmem:[%s5 + $0x60] sm:$0xff]
  %v250 = vld [vmem:[%s5 + $0x68] sm:$0xff]
  %v251 = vld [vmem:[%s5 + $0x70] sm:$0xff]
  %v252 = vld [vmem:[%s5 + $0x78] sm:$0xff]
  %v253 = vld [vmem:[%s6] sm:$0x1]
  %v255 = vlaneseq
  %v256 = vshrl.u32 %v255, 7
  %v257 = vsub.s32 0, %v256
  %v258 = vrot.slane %v253, %v257
  %260 = vmatprep.subr.mxu0 0.0
  %261 = vmatpush1.msra.mxu0 %v252
  %262 = vmatprep.subr.mxu0 0.0
  %263 = vmatpush1.msra.mxu0 %v251
  %264 = vmatprep.subr.mxu0 0.0
  %265 = vmatpush1.msra.mxu0 %v250
  %266 = vmatprep.subr.mxu0 0.0
  %267 = vmatpush1.msra.mxu0 %v249
  %268 = vmatprep.subr.mxu0 0.0
  %269 = vmatpush1.msra.mxu0 %v248
  %270 = vmatprep.subr.mxu0 0.0
  %271 = vmatpush1.msra.mxu0 %v247
  %272 = vmatprep.subr.mxu0 0.0
  %273 = vmatpush1.msra.mxu0 %v246
  %274 = vmatprep.subr.mxu0 0.0
  %275 = vmatpush1.msra.mxu0 %v245
  %276 = vmatprep.subr.mxu0 0.0
  %277 = vmatpush1.msra.mxu0 %v244
  %278 = vmatprep.subr.mxu0 0.0
  %279 = vmatpush1.msra.mxu0 %v243
  %280 = vmatprep.subr.mxu0 0.0
  %281 = vmatpush1.msra.mxu0 %v242
  %282 = vmatprep.subr.mxu0 0.0
  %283 = vmatpush1.msra.mxu0 %v241
  %284 = vmatprep.subr.mxu0 0.0
  %285 = vmatpush1.msra.mxu0 %v240
  %286 = vmatprep.subr.mxu0 0.0
  %287 = vmatpush1.msra.mxu0 %v239
  %288 = vmatprep.subr.mxu0 0.0
  %289 = vmatpush1.msra.mxu0 %v238
  %290 = vmatprep.subr.mxu0 0.0
  %291 = vmatpush1.msra.mxu0 %v237
  %292 = vmatprep.subr.mxu0 0.0
  %293 = vmatpush2.msra.mxu0 0.0
  %294 = vmatprep.subr.mxu0 0.0
  %295 = vmatpush2.msra.mxu0 0.0
  %296 = vmatprep.subr.mxu0 0.0
  %297 = vmatpush2.msra.mxu0 0.0
  %298 = vmatprep.subr.mxu0 0.0
  %299 = vmatpush2.msra.mxu0 0.0
  %300 = vmatprep.subr.mxu0 0.0
  %301 = vmatpush2.msra.mxu0 0.0
  %302 = vmatprep.subr.mxu0 0.0
  %303 = vmatpush2.msra.mxu0 0.0
  %304 = vmatprep.subr.mxu0 0.0
  %305 = vmatpush2.msra.mxu0 0.0
  %306 = vmatprep.subr.mxu0 0.0
  %307 = vmatpush2.msra.mxu0 0.0
  %308 = vmatprep.subr.mxu0 0.0
  %309 = vmatpush2.msra.mxu0 0.0
  %310 = vmatprep.subr.mxu0 0.0
  %311 = vmatpush2.msra.mxu0 0.0
  %312 = vmatprep.subr.mxu0 0.0
  %313 = vmatpush2.msra.mxu0 0.0
  %314 = vmatprep.subr.mxu0 0.0
  %315 = vmatpush2.msra.mxu0 0.0
  %316 = vmatprep.subr.mxu0 0.0
  %317 = vmatpush2.msra.mxu0 0.0
  %318 = vmatprep.subr.mxu0 0.0
  %319 = vmatpush2.msra.mxu0 0.0
  %320 = vmatprep.subr.mxu0 0.0
  %321 = vmatpush2.msra.mxu0 0.0
  %322 = vmatprep.subr.mxu0 0.0
  %323 = vmatpush2.msra.mxu0 0.0
  %324 = vmatprep.mubr.f32.mxu0 0.0
  %325 = vmatmul.mubr.f32.gmra.mxu0 %v235
  %v326 = vpop.f32.mrf.mxu0
  %v327 = vadd.f32 %v258, %v326
  %v328 = vpop.f32.mrf.mxu0
  %329 = vmatprep.mubr.f32.mxu0 0.0
  %330 = vmatmul.mubr.f32.gmra.mxu0 %v236
  %v331 = vpop.f32.mrf.mxu0
  %v332 = vadd.f32 %v258, %v331
  %v333 = vpop.f32.mrf.mxu0
  %334 = vdwg.mxu0
  %v335 = vmax.f32 %v327, 0.0
  %v336 = vmax.f32 %v332, 0.0
  %v337 = vld [vmem:[%s7] sm:$0xff]
  %v338 = vld [vmem:[%s7 + $0x8] sm:$0xff]
  %v339 = vld [vmem:[%s7 + $0x10] sm:$0xff]
  %v340 = vld [vmem:[%s7 + $0x18] sm:$0xff]
  %v341 = vld [vmem:[%s7 + $0x20] sm:$0xff]
  %v342 = vld [vmem:[%s7 + $0x28] sm:$0xff]
  %v343 = vld [vmem:[%s7 + $0x30] sm:$0xff]
  %v344 = vld [vmem:[%s7 + $0x38] sm:$0xff]
  %v345 = vld [vmem:[%s7 + $0x40] sm:$0xff]
  %v346 = vld [vmem:[%s7 + $0x48] sm:$0xff]
  %v347 = vld [vmem:[%s7 + $0x50] sm:$0xff]
  %v348 = vld [vmem:[%s7 + $0x58] sm:$0xff]
  %v349 = vld [vmem:[%s7 + $0x60] sm:$0xff]
  %v350 = vld [vmem:[%s7 + $0x68] sm:$0xff]
  %v351 = vld [vmem:[%s7 + $0x70] sm:$0xff]
  %v352 = vld [vmem:[%s7 + $0x78] sm:$0xff]
  %v353 = vld [vmem:[%s8] sm:$0x1]
  %v355 = vlaneseq
  %v356 = vshrl.u32 %v355, 7
  %v357 = vsub.s32 0, %v356
  %v358 = vrot.slane %v353, %v357
  %360 = vmatprep.subr.mxu0 0.0
  %361 = vmatpush1.msra.mxu0 %v352
  %362 = vmatprep.subr.mxu0 0.0
  %363 = vmatpush1.msra.mxu0 %v351
  %364 = vmatprep.subr.mxu0 0.0
  %365 = vmatpush1.msra.mxu0 %v350
  %366 = vmatprep.subr.mxu0 0.0
  %367 = vmatpush1.msra.mxu0 %v349
  %368 = vmatprep.subr.mxu0 0.0
  %369 = vmatpush1.msra.mxu0 %v348
  %370 = vmatprep.subr.mxu0 0.0
  %371 = vmatpush1.msra.mxu0 %v347
  %372 = vmatprep.subr.mxu0 0.0
  %373 = vmatpush1.msra.mxu0 %v346
  %374 = vmatprep.subr.mxu0 0.0
  %375 = vmatpush1.msra.mxu0 %v345
  %376 = vmatprep.subr.mxu0 0.0
  %377 = vmatpush1.msra.mxu0 %v344
  %378 = vmatprep.subr.mxu0 0.0
  %379 = vmatpush1.msra.mxu0 %v343
  %380 = vmatprep.subr.mxu0 0.0
  %381 = vmatpush1.msra.mxu0 %v342
  %382 = vmatprep.subr.mxu0 0.0
  %383 = vmatpush1.msra.mxu0 %v341
  %384 = vmatprep.subr.mxu0 0.0
  %385 = vmatpush1.msra.mxu0 %v340
  %386 = vmatprep.subr.mxu0 0.0
  %387 = vmatpush1.msra.mxu0 %v339
  %388 = vmatprep.subr.mxu0 0.0
  %389 = vmatpush1.msra.mxu0 %v338
  %390 = vmatprep.subr.mxu0 0.0
  %391 = vmatpush1.msra.mxu0 %v337
  %392 = vmatprep.subr.mxu0 0.0
  %393 = vmatpush2.msra.mxu0 0.0
  %394 = vmatprep.subr.mxu0 0.0
  %395 = vmatpush2.msra.mxu0 0.0
  %396 = vmatprep.subr.mxu0 0.0
  %397 = vmatpush2.msra.mxu0 0.0
  %398 = vmatprep.subr.mxu0 0.0
  %399 = vmatpush2.msra.mxu0 0.0
  %400 = vmatprep.subr.mxu0 0.0
  %401 = vmatpush2.msra.mxu0 0.0
  %402 = vmatprep.subr.mxu0 0.0
  %403 = vmatpush2.msra.mxu0 0.0
  %404 = vmatprep.subr.mxu0 0.0
  %405 = vmatpush2.msra.mxu0 0.0
  %406 = vmatprep.subr.mxu0 0.0
  %407 = vmatpush2.msra.mxu0 0.0
  %408 = vmatprep.subr.mxu0 0.0
  %409 = vmatpush2.msra.mxu0 0.0
  %410 = vmatprep.subr.mxu0 0.0
  %411 = vmatpush2.msra.mxu0 0.0
  %412 = vmatprep.subr.mxu0 0.0
  %413 = vmatpush2.msra.mxu0 0.0
  %414 = vmatprep.subr.mxu0 0.0
  %415 = vmatpush2.msra.mxu0 0.0
  %416 = vmatprep.subr.mxu0 0.0
  %417 = vmatpush2.msra.mxu0 0.0
  %418 = vmatprep.subr.mxu0 0.0
  %419 = vmatpush2.msra.mxu0 0.0
  %420 = vmatprep.subr.mxu0 0.0
  %421 = vmatpush2.msra.mxu0 0.0
  %422 = vmatprep.subr.mxu0 0.0
  %423 = vmatpush2.msra.mxu0 0.0
  %424 = vmatprep.mubr.f32.mxu0 0.0
  %425 = vmatmul.mubr.f32.gmra.mxu0 %v335
  %v426 = vpop.f32.mrf.mxu0
  %v427 = vadd.f32 %v358, %v426
  %v428 = vpop.f32.mrf.mxu0
  %429 = vmatprep.mubr.f32.mxu0 0.0
  %430 = vmatmul.mubr.f32.gmra.mxu0 %v336
  %v431 = vpop.f32.mrf.mxu0
  %v432 = vadd.f32 %v358, %v431
  %v433 = vpop.f32.mrf.mxu0
  %434 = vdwg.mxu0
  %v435 = vmax.f32 %v427, 0.0
  %v436 = vmax.f32 %v432, 0.0
  %v437 = vld [vmem:[%s9] sm:$0xff]
  %v438 = vld [vmem:[%s9 + $0x8] sm:$0xff]
  %v439 = vld [vmem:[%s9 + $0x10] sm:$0xff]
  %v440 = vld [vmem:[%s9 + $0x18] sm:$0xff]
  %v441 = vld [vmem:[%s9 + $0x20] sm:$0xff]
  %v442 = vld [vmem:[%s9 + $0x28] sm:$0xff]
  %v443 = vld [vmem:[%s9 + $0x30] sm:$0xff]
  %v444 = vld [vmem:[%s9 + $0x38] sm:$0xff]
  %v445 = vld [vmem:[%s9 + $0x40] sm:$0xff]
  %v446 = vld [vmem:[%s9 + $0x48] sm:$0xff]
  %v447 = vld [vmem:[%s9 + $0x50] sm:$0xff]
  %v448 = vld [vmem:[%s9 + $0x58] sm:$0xff]
  %v449 = vld [vmem:[%s9 + $0x60] sm:$0xff]
  %v450 = vld [vmem:[%s9 + $0x68] sm:$0xff]
  %v451 = vld [vmem:[%s9 + $0x70] sm:$0xff]
  %v452 = vld [vmem:[%s9 + $0x78] sm:$0xff]
  %v453 = vld [vmem:[%s10] sm:$0x1]
  %v455 = vlaneseq
  %v456 = vshrl.u32 %v455, 7
  %v457 = vsub.s32 0, %v456
  %v458 = vrot.slane %v453, %v457
  %460 = vmatprep.subr.mxu0 0.0
  %461 = vmatpush1.msra.mxu0 %v452
  %462 = vmatprep.subr.mxu0 0.0
  %463 = vmatpush1.msra.mxu0 %v451
  %464 = vmatprep.subr.mxu0 0.0
  %465 = vmatpush1.msra.mxu0 %v450
  %466 = vmatprep.subr.mxu0 0.0
  %467 = vmatpush1.msra.mxu0 %v449
  %468 = vmatprep.subr.mxu0 0.0
  %469 = vmatpush1.msra.mxu0 %v448
  %470 = vmatprep.subr.mxu0 0.0
  %471 = vmatpush1.msra.mxu0 %v447
  %472 = vmatprep.subr.mxu0 0.0
  %473 = vmatpush1.msra.mxu0 %v446
  %474 = vmatprep.subr.mxu0 0.0
  %475 = vmatpush1.msra.mxu0 %v445
  %476 = vmatprep.subr.mxu0 0.0
  %477 = vmatpush1.msra.mxu0 %v444
  %478 = vmatprep.subr.mxu0 0.0
  %479 = vmatpush1.msra.mxu0 %v443
  %480 = vmatprep.subr.mxu0 0.0
  %481 = vmatpush1.msra.mxu0 %v442
  %482 = vmatprep.subr.mxu0 0.0
  %483 = vmatpush1.msra.mxu0 %v441
  %484 = vmatprep.subr.mxu0 0.0
  %485 = vmatpush1.msra.mxu0 %v440
  %486 = vmatprep.subr.mxu0 0.0
  %487 = vmatpush1.msra.mxu0 %v439
  %488 = vmatprep.subr.mxu0 0.0
  %489 = vmatpush1.msra.mxu0 %v438
  %490 = vmatprep.subr.mxu0 0.0
  %491 = vmatpush1.msra.mxu0 %v437
  %492 = vmatprep.subr.mxu0 0.0
  %493 = vmatpush2.msra.mxu0 0.0
  %494 = vmatprep.subr.mxu0 0.0
  %495 = vmatpush2.msra.mxu0 0.0
  %496 = vmatprep.subr.mxu0 0.0
  %497 = vmatpush2.msra.mxu0 0.0
  %498 = vmatprep.subr.mxu0 0.0
  %499 = vmatpush2.msra.mxu0 0.0
  %500 = vmatprep.subr.mxu0 0.0
  %501 = vmatpush2.msra.mxu0 0.0
  %502 = vmatprep.subr.mxu0 0.0
  %503 = vmatpush2.msra.mxu0 0.0
  %504 = vmatprep.subr.mxu0 0.0
  %505 = vmatpush2.msra.mxu0 0.0
  %506 = vmatprep.subr.mxu0 0.0
  %507 = vmatpush2.msra.mxu0 0.0
  %508 = vmatprep.subr.mxu0 0.0
  %509 = vmatpush2.msra.mxu0 0.0
  %510 = vmatprep.subr.mxu0 0.0
  %511 = vmatpush2.msra.mxu0 0.0
  %512 = vmatprep.subr.mxu0 0.0
  %513 = vmatpush2.msra.mxu0 0.0
  %514 = vmatprep.subr.mxu0 0.0
  %515 = vmatpush2.msra.mxu0 0.0
  %516 = vmatprep.subr.mxu0 0.0
  %517 = vmatpush2.msra.mxu0 0.0
  %518 = vmatprep.subr.mxu0 0.0
  %519 = vmatpush2.msra.mxu0 0.0
  %520 = vmatprep.subr.mxu0 0.0
  %521 = vmatpush2.msra.mxu0 0.0
  %522 = vmatprep.subr.mxu0 0.0
  %523 = vmatpush2.msra.mxu0 0.0
  %524 = vmatprep.mubr.f32.mxu0 0.0
  %525 = vmatmul.mubr.f32.gmra.mxu0 %v435
  %v526 = vpop.f32.mrf.mxu0
  %v527 = vadd.f32 %v458, %v526
  %v528 = vpop.f32.mrf.mxu0
  %529 = vmatprep.mubr.f32.mxu0 0.0
  %530 = vmatmul.mubr.f32.gmra.mxu0 %v436
  %v531 = vpop.f32.mrf.mxu0
  %v532 = vadd.f32 %v458, %v531
  %v533 = vpop.f32.mrf.mxu0
  %534 = vdwg.mxu0
  %535 = vst [vmem:[%s11] sm:$0xff] %v527
  %536 = vst [vmem:[%s11 + $0x8] sm:$0xff] %v532
  // Predicated region
  $region46: #{dog_sound_model_forward.1} parent=0 // pred_check
    _
  $region47: #{dog_sound_model_forward.1} parent=0 // pred_check_branch
    %538 = sbr.rel (0) target = $region49
  $region48: #{dog_sound_model_forward.1} parent=0 // pred_region
    _
  $region49: #{dog_sound_model_forward.1} parent=0 // pred_fallthru
    _
  // Predicated region
  $region50: #{dog_sound_model_forward.1} parent=0 // pred_check
    _
  $region51: #{dog_sound_model_forward.1} parent=0 // pred_check_branch
    %540 = sbr.rel (0) target = $region53
  $region52: #{dog_sound_model_forward.1} parent=0 // pred_region
    _
  $region53: #{dog_sound_model_forward.1} parent=0 // pred_fallthru
    _

</llo_original>
